<compile_context>
chip_gen: v7x
topology: tpu7x:2x2x1
jax: 0.10.0
libtpu: 0.0.40
codegen_flags: <defaults>
</compile_context>

<pallas_src>
import functools

import jax
import jax.numpy as jnp
from jax.experimental import pallas as pl
from jax.experimental.pallas import tpu as pltpu


def _round_up(a, b):
    return ((a + b - 1) // b) * b


def _fc_kernel(x_ref, w_ref, b_ref, o_ref, acc_ref, *, use_activation):
    k = pl.program_id(2)

    @pl.when(k == 0)
    def _init():
        acc_ref[...] = jnp.zeros_like(acc_ref)

    x = x_ref[...]
    if use_activation:
        # tanh in f32 for parity with the PyTorch reference. Padded K entries
        # are zero and multiply zero weight columns, so they contribute nothing.
        # (Recomputed once per N tile; free filler in the EUP slot when MXU-bound.)
        x = jnp.tanh(x.astype(jnp.float32))
    x = x.astype(w_ref.dtype)  # native MXU operand dtype (no f32 upcast of operands)

    # x: (tm, tk), w: (tn, tk) in native (out_dim, in_dim) layout.
    # Contract x axis 1 with w axis 1 -> (tm, tn); f32 accumulation on the MXU.
    acc_ref[...] += jax.lax.dot_general(
        x, w_ref[...],
        dimension_numbers=(((1,), (1,)), ((), ())),
        preferred_element_type=jnp.float32)

    @pl.when(k == pl.num_programs(2) - 1)
    def _finalize():
        o_ref[...] = (acc_ref[...] + b_ref[...].astype(jnp.float32)).astype(o_ref.dtype)


def fc_layer(x, weight, bias, *, use_activation=True,
             tm_max=256, tn_max=256, tk_max=512):
    """FCLayer forward: dropout (eval no-op) -> [tanh] -> x @ W.T + b.

    x: (B, in_dim); weight: (out_dim, in_dim); bias: (out_dim,).
    """
    # TODO(synk): nn.Dropout(p=0.9) is identity in eval mode; training-mode
    # stochastic dropout is not implemented here.
    B, D_in = x.shape
    D_out, D_in2 = weight.shape
    assert D_in == D_in2 and bias.shape == (D_out,)

    # Tile sizes: sublane dim multiple of 8, lane dims multiples of 128; capped
    # so double-buffered tiles stay far below the scoped-VMEM limit on every
    # generation (v5e 16 MiB default ... v7x 64 MiB physical per TC).
    tm = min(tm_max, _round_up(B, 8))
    tn = min(tn_max, _round_up(D_out, 128))
    tk = min(tk_max, _round_up(D_in, 128))

    M = _round_up(B, tm)
    N = _round_up(D_out, tn)
    K = _round_up(D_in, tk)

    # Zero-pad to aligned shapes (lane-dense output); the pad is sliced off
    # afterwards. Zero K-padding is exact: padded weight columns are zero.
    x_p = x if (M == B and K == D_in) else jnp.pad(x, ((0, M - B), (0, K - D_in)))
    w_p = (weight if (N == D_out and K == D_in)
           else jnp.pad(weight, ((0, N - D_out), (0, K - D_in))))
    b_p = (bias if N == D_out else jnp.pad(bias, (0, N - D_out))).reshape(1, N)

    grid = (M // tm, N // tn, K // tk)
    itemsize = jnp.dtype(x.dtype).itemsize

    out = pl.pallas_call(
        functools.partial(_fc_kernel, use_activation=use_activation),
        out_shape=jax.ShapeDtypeStruct((M, N), x.dtype),
        grid_spec=pltpu.PrefetchScalarGridSpec(
            num_scalar_prefetch=0,
            grid=grid,
            in_specs=[
                pl.BlockSpec((tm, tk), lambda i, j, k: (i, k)),   # x tile
                pl.BlockSpec((tn, tk), lambda i, j, k: (j, k)),   # W tile (native layout)
                pl.BlockSpec((1, tn), lambda i, j, k: (0, j)),    # bias tile
            ],
            out_specs=pl.BlockSpec((tm, tn), lambda i, j, k: (i, j)),
            scratch_shapes=[pltpu.VMEM((tm, tn), jnp.float32)],
        ),
        compiler_params=pltpu.CompilerParams(
            dimension_semantics=("parallel", "parallel", "arbitrary"),
            vmem_limit_bytes=32 * 1024 * 1024,
        ),
        cost_estimate=pl.CostEstimate(
            flops=2 * M * N * K,
            transcendentals=(M * K) if use_activation else 0,
            bytes_accessed=(M * K + N * K + N + M * N) * itemsize,
        ),
    )(x_p, w_p, b_p)

    return out[:B, :D_out]


def _reference(x, weight, bias, use_activation=True):
    h = jnp.tanh(x) if use_activation else x
    y = jax.lax.dot_general(h, weight,
                            dimension_numbers=(((1,), (1,)), ((), ())),
                            precision=jax.lax.Precision.HIGHEST,
                            preferred_element_type=jnp.float32)
    return (y + bias).astype(x.dtype)


if __name__ == "__main__":
    key = jax.random.PRNGKey(0)

    def make_case(k, B, D_in, D_out):
        k_x, k_w, k_b = jax.random.split(k, 3)
        bound = 1.0 / (D_in ** 0.5)
        x = jax.random.normal(k_x, (B, D_in), dtype=jnp.float32)
        w = jax.random.uniform(k_w, (D_out, D_in), minval=-bound, maxval=bound,
                               dtype=jnp.float32)
        b = jax.random.uniform(k_b, (D_out,), minval=-bound, maxval=bound,
                               dtype=jnp.float32)
        return x, w, b

    k1, k2 = jax.random.split(key)

    # Small shape consistent with the module: batch=8, input_dim=32, output_dim=16.
    x, w, b = make_case(k1, 8, 32, 16)
    y = jax.block_until_ready(fc_layer(x, w, b, use_activation=True))
    y_ref = _reference(x, w, b, use_activation=True)
    assert y.shape == y_ref.shape
    assert jnp.allclose(y, y_ref, atol=1e-3, rtol=1e-3), "mismatch vs reference (small case)"

    # Slightly larger case exercising multiple K and N grid steps (accumulator path).
    x2, w2, b2 = make_case(k2, 16, 1100, 300)
    y2 = jax.block_until_ready(fc_layer(x2, w2, b2, use_activation=True))
    y2_ref = _reference(x2, w2, b2, use_activation=True)
    assert jnp.allclose(y2, y2_ref, atol=1e-3, rtol=1e-3), "mismatch vs reference (tiled case)"

    print("KERNEL_OK")
</pallas_src>

<mosaic_0001>
module attributes {stable_mosaic.version = 11 : i64} {
  func.func @_fc_kernel(%arg0: i32, %arg1: i32, %arg2: i32, %arg3: memref<8x128xf32, #tpu.memory_space<vmem>>, %arg4: memref<128x128xf32, #tpu.memory_space<vmem>>, %arg5: memref<1x128xf32, #tpu.memory_space<vmem>>, %arg6: memref<8x128xf32, #tpu.memory_space<vmem>>, %arg7: memref<8x128xf32, #tpu.memory_space<vmem>>) attributes {dimension_semantics = [#tpu.dimension_semantics<parallel>, #tpu.dimension_semantics<parallel>, #tpu.dimension_semantics<arbitrary>], iteration_bounds = array<i64: 1, 1, 1>, scalar_prefetch = 0 : i64, scratch_operands = 1 : i64, tpu.core_type = #tpu.core_type<tc>, window_params = [{transform_indices = @transform_0, window_bounds = array<i64: 8, 128>}, {transform_indices = @transform_1, window_bounds = array<i64: 128, 128>}, {transform_indices = @transform_2, window_bounds = array<i64: 1, 128>}, {transform_indices = @transform_3, window_bounds = array<i64: 8, 128>}]} {
    %c0_i32 = arith.constant 0 : i32
    %0 = arith.cmpi eq, %arg2, %c0_i32 : i32
    %1 = arith.extui %0 : i1 to i32
    %c0_i32_0 = arith.constant 0 : i32
    %2 = arith.cmpi ne, %1, %c0_i32_0 : i32
    scf.if %2 {
      %cst_10 = arith.constant 0.000000e+00 : f32
      %13 = vector.broadcast %cst_10 : f32 to vector<8x128xf32>
      %c0_11 = arith.constant 0 : index
      %c0_12 = arith.constant 0 : index
      %14 = vector.load %arg7[%c0_11, %c0_12] : memref<8x128xf32, #tpu.memory_space<vmem>>, vector<8x128xf32>
      tpu.vector_store %arg7[%c0_11, %c0_12], %13 {strides = array<i32>} : memref<8x128xf32, #tpu.memory_space<vmem>>, vector<8x128xf32>,
    } else {
    }
    %c0 = arith.constant 0 : index
    %c0_1 = arith.constant 0 : index
    %3 = vector.load %arg3[%c0, %c0_1] : memref<8x128xf32, #tpu.memory_space<vmem>>, vector<8x128xf32>
    %4 = math.tanh %3 : vector<8x128xf32>
    %c0_2 = arith.constant 0 : index
    %c0_3 = arith.constant 0 : index
    %5 = vector.load %arg7[%c0_2, %c0_3] : memref<8x128xf32, #tpu.memory_space<vmem>>, vector<8x128xf32>
    %c0_4 = arith.constant 0 : index
    %c0_5 = arith.constant 0 : index
    %6 = vector.load %arg4[%c0_4, %c0_5] : memref<128x128xf32, #tpu.memory_space<vmem>>, vector<128x128xf32>
    %cst = arith.constant dense<0.000000e+00> : vector<8x128xf32>
    %7 = tpu.matmul %4, %6, %cst {dimension_numbers = #tpu.dot_dimension_numbers<[1], [1], [0], [0], [0, 0, 1, 0], [], []>} : vector<8x128xf32>, vector<128x128xf32>, vector<8x128xf32> -> vector<8x128xf32>
    %8 = arith.addf %5, %7 : vector<8x128xf32>
    %c0_6 = arith.constant 0 : index
    %c0_7 = arith.constant 0 : index
    %9 = vector.load %arg7[%c0_6, %c0_7] : memref<8x128xf32, #tpu.memory_space<vmem>>, vector<8x128xf32>
    tpu.vector_store %arg7[%c0_6, %c0_7], %8 {strides = array<i32>} : memref<8x128xf32, #tpu.memory_space<vmem>>, vector<8x128xf32>,
    %c0_i32_8 = arith.constant 0 : i32
    %10 = arith.cmpi eq, %arg2, %c0_i32_8 : i32
    %11 = arith.extui %10 : i1 to i32
    %c0_i32_9 = arith.constant 0 : i32
    %12 = arith.cmpi ne, %11, %c0_i32_9 : i32
    scf.if %12 {
      %c0_10 = arith.constant 0 : index
      %c0_11 = arith.constant 0 : index
      %13 = vector.load %arg7[%c0_10, %c0_11] : memref<8x128xf32, #tpu.memory_space<vmem>>, vector<8x128xf32>
      %c0_12 = arith.constant 0 : index
      %c0_13 = arith.constant 0 : index
      %14 = vector.load %arg5[%c0_12, %c0_13] : memref<1x128xf32, #tpu.memory_space<vmem>>, vector<1x128xf32>
      %15 = vector.broadcast %14 : vector<1x128xf32> to vector<8x128xf32>
      %16 = arith.addf %13, %15 : vector<8x128xf32>
      %c0_14 = arith.constant 0 : index
      %c0_15 = arith.constant 0 : index
      %17 = vector.load %arg6[%c0_14, %c0_15] : memref<8x128xf32, #tpu.memory_space<vmem>>, vector<8x128xf32>
      tpu.vector_store %arg6[%c0_14, %c0_15], %16 {strides = array<i32>} : memref<8x128xf32, #tpu.memory_space<vmem>>, vector<8x128xf32>,
    } else {
    }
    return
  }
  func.func @transform_0(%arg0: i32, %arg1: i32, %arg2: i32) -> (i32, i32) {
    %c0_i32 = arith.constant 0 : i32
    return %arg0, %arg2 : i32, i32
  }
  func.func @transform_1(%arg0: i32, %arg1: i32, %arg2: i32) -> (i32, i32) {
    %c0_i32 = arith.constant 0 : i32
    return %arg1, %arg2 : i32, i32
  }
  func.func @transform_2(%arg0: i32, %arg1: i32, %arg2: i32) -> (i32, i32) {
    %c0_i32 = arith.constant 0 : i32
    %c0_i32_0 = arith.constant 0 : i32
    return %c0_i32, %arg1 : i32, i32
  }
  func.func @transform_3(%arg0: i32, %arg1: i32, %arg2: i32) -> (i32, i32) {
    %c0_i32 = arith.constant 0 : i32
    return %arg0, %arg1 : i32, i32
  }
}

</mosaic_0001>

<llo_original>
// kernel: tpu_custom_call.1
$region0: #{tpu_custom_call.1}
  #allocation0 [shape = 'u32[]', space=smem, size = 0x4, offset = 0x4, fixed_abs, tag = 'smem constant byte address 0x4 - core index']
  #allocation1 [shape = 'u32[144,128]{1,0:T(1,128)}', space=vmem, size = 0x12000, scoped, tag = 'internal scratch']
  #allocation2 [shape = 'f32[8,128]{1,0:T(8,128)}', space=vmem, size = 0x1000, scoped, tag = 'scratch operand']
  %s0 = inlined_call_operand.hbm [shape: f32[8,128], index: 0, kind: input, shape index: {}]
  %s1 = inlined_call_operand.hbm [shape: f32[128,128], index: 1, kind: input, shape index: {}]
  %s2 = inlined_call_operand.vmem [shape: f32[1,128], index: 2, kind: input, shape index: {}]
  %s3 = inlined_call_operand.hbm [shape: f32[8,128], index: 3, kind: output, shape index: {}]
  %s4 = sld [smem:[#allocation0]]
  $region38: #{tpu_custom_call.1} parent=0
    _
  %s6 = ssub.s32 1, %s4
  %s7 = scalar_select 0, %s6, %s4
  $region1: #{tpu_custom_call.1} parent=0
    #allocation3 [shape = 'u8[4096]{0}', space=vmem, size = 0x1000, scoped, tag = 'input window, operand 0, single buffered']
    #allocation4 [shape = 's32[1]{0}', space=sflag, size = 0x4, scoped, tag = 'scoped memory for tpu_custom_call.1']
    #allocation5 [shape = 's32[1]{0}', space=sflag, size = 0x4, scoped, tag = 'scoped memory for tpu_custom_call.1']
    #allocation6 [shape = 'u8[65536]{0}', space=vmem, size = 0x10000, scoped, tag = 'input window, operand 1, single buffered']
    #allocation7 [shape = 's32[1]{0}', space=sflag, size = 0x4, scoped, tag = 'scoped memory for tpu_custom_call.1']
    #allocation8 [shape = 'u8[4096]{0}', space=vmem, size = 0x1000, scoped, tag = 'output window, operand 0, single buffered']
    %8 = vsyncpa [#allocation4], 0
    %9 = vsyncpa [#allocation7], 0
    %10 = vsyncpa [#allocation5], 0
    // Predicated region
    $region2: #{tpu_custom_call.1} parent=1 // pred_check
      _
    $region3: #{tpu_custom_call.1} parent=1 // pred_check_branch
      %12 = sbr.rel (0) target = $region5
    $region4: #{tpu_custom_call.1} parent=1 // pred_region
      %s14 = ssub.s32 128, 128
      %15 = vsyncadd [#allocation4], %s14
      %s17 = sshll.u32 [#allocation3], 4
      %s18 = int_to_ptr.vmem [resolvable:$true] %s17
      %20 = dma.hbm_to_vmem [thread:$0]  %s0, 128, %s18, [#allocation4]
    $region5: #{tpu_custom_call.1} parent=1 // pred_fallthru
      _
    // Predicated region
    $region6: #{tpu_custom_call.1} parent=1 // pred_check
      _
    $region7: #{tpu_custom_call.1} parent=1 // pred_check_branch
      %22 = sbr.rel (0) target = $region9
    $region8: #{tpu_custom_call.1} parent=1 // pred_region
      %s24 = ssub.s32 2048, 2048
      %25 = vsyncadd [#allocation7], %s24
      %s26 = sshll.u32 [#allocation6], 4
      %s27 = int_to_ptr.vmem [resolvable:$true] %s26
      %32 = dma.hbm_to_vmem [thread:$0]  %s1, 2048, %s27, [#allocation7], 128, 128, 8
    $region9: #{tpu_custom_call.1} parent=1 // pred_fallthru
      _
    // Predicated region
    $region10: #{tpu_custom_call.1} parent=1 // pred_check
      _
    $region11: #{tpu_custom_call.1} parent=1 // pred_check_branch
      %34 = sbr.rel (0) target = $region13
    $region12: #{tpu_custom_call.1} parent=1 // pred_region
      _
    $region13: #{tpu_custom_call.1} parent=1 // pred_fallthru
      _
    // Predicated region
    $region14: #{tpu_custom_call.1} parent=1 // pred_check
      _
    $region15: #{tpu_custom_call.1} parent=1 // pred_check_branch
      %36 = sbr.rel (0) target = $region17
    $region16: #{tpu_custom_call.1} parent=1 // pred_region
      %37 = dma.done [#allocation4], 128
    $region17: #{tpu_custom_call.1} parent=1 // pred_fallthru
      _
    // Predicated region
    $region18: #{tpu_custom_call.1} parent=1 // pred_check
      _
    $region19: #{tpu_custom_call.1} parent=1 // pred_check_branch
      %39 = sbr.rel (0) target = $region21
    $region20: #{tpu_custom_call.1} parent=1 // pred_region
      %40 = dma.done [#allocation7], 2048
    $region21: #{tpu_custom_call.1} parent=1 // pred_fallthru
      _
    %p41 = scmp.eq.s32.totalorder 0, 0
    // Predicated region
    $region22: #{tpu_custom_call.1} parent=1 // pred_check
      %p42 = pneg %p41
    $region23: #{tpu_custom_call.1} parent=1 // pred_check_branch
      %44 = sbr.rel (%p42) target = $region25
    $region24: #{tpu_custom_call.1} parent=1 // pred_region
      %45 = vst [vmem:[#allocation2] sm:$0xff] 0.0
    $region25: #{tpu_custom_call.1} parent=1 // pred_fallthru
      _
    %v46 = vld [vmem:[#allocation3] sm:$0xff]
    %v47 = vtanh.pop %v46
    %v48 = vld [vmem:[#allocation2] sm:$0xff]
    %v49 = vld [vmem:[#allocation6] sm:$0xff]
    %v50 = vld [vmem:[#allocation6 + $0x8] sm:$0xff]
    %v51 = vld [vmem:[#allocation6 + $0x10] sm:$0xff]
    %v52 = vld [vmem:[#allocation6 + $0x18] sm:$0xff]
    %v53 = vld [vmem:[#allocation6 + $0x20] sm:$0xff]
    %v54 = vld [vmem:[#allocation6 + $0x28] sm:$0xff]
    %v55 = vld [vmem:[#allocation6 + $0x30] sm:$0xff]
    %v56 = vld [vmem:[#allocation6 + $0x38] sm:$0xff]
    %v57 = vld [vmem:[#allocation6 + $0x40] sm:$0xff]
    %v58 = vld [vmem:[#allocation6 + $0x48] sm:$0xff]
    %v59 = vld [vmem:[#allocation6 + $0x50] sm:$0xff]
    %v60 = vld [vmem:[#allocation6 + $0x58] sm:$0xff]
    %v61 = vld [vmem:[#allocation6 + $0x60] sm:$0xff]
    %v62 = vld [vmem:[#allocation6 + $0x68] sm:$0xff]
    %v63 = vld [vmem:[#allocation6 + $0x70] sm:$0xff]
    %v64 = vld [vmem:[#allocation6 + $0x78] sm:$0xff]
    %65 = vmatprep.subr.mxu0 0.0
    %66 = vmatpush1.xpose.msra.mxu0 %v49
    %67 = vmatprep.subr.mxu0 0.0
    %68 = vmatpush1.xpose.msra.mxu0 %v50
    %69 = vmatprep.subr.mxu0 0.0
    %70 = vmatpush1.xpose.msra.mxu0 %v51
    %71 = vmatprep.subr.mxu0 0.0
    %72 = vmatpush1.xpose.msra.mxu0 %v52
    %73 = vmatprep.subr.mxu0 0.0
    %74 = vmatpush1.xpose.msra.mxu0 %v53
    %75 = vmatprep.subr.mxu0 0.0
    %76 = vmatpush1.xpose.msra.mxu0 %v54
    %77 = vmatprep.subr.mxu0 0.0
    %78 = vmatpush1.xpose.msra.mxu0 %v55
    %79 = vmatprep.subr.mxu0 0.0
    %80 = vmatpush1.xpose.msra.mxu0 %v56
    %81 = vmatprep.subr.mxu0 0.0
    %82 = vmatpush1.xpose.msra.mxu0 %v57
    %83 = vmatprep.subr.mxu0 0.0
    %84 = vmatpush1.xpose.msra.mxu0 %v58
    %85 = vmatprep.subr.mxu0 0.0
    %86 = vmatpush1.xpose.msra.mxu0 %v59
    %87 = vmatprep.subr.mxu0 0.0
    %88 = vmatpush1.xpose.msra.mxu0 %v60
    %89 = vmatprep.subr.mxu0 0.0
    %90 = vmatpush1.xpose.msra.mxu0 %v61
    %91 = vmatprep.subr.mxu0 0.0
    %92 = vmatpush1.xpose.msra.mxu0 %v62
    %93 = vmatprep.subr.mxu0 0.0
    %94 = vmatpush1.xpose.msra.mxu0 %v63
    %95 = vmatprep.subr.mxu0 0.0
    %96 = vmatpush1.xpose.msra.mxu0 %v64
    %97 = vmatprep.subr.mxu0 0.0
    %98 = vmatpush1.xpose.msra.mxu0 0.0
    %99 = vmatprep.subr.mxu0 0.0
    %100 = vmatpush1.xpose.msra.mxu0 0.0
    %101 = vmatprep.subr.mxu0 0.0
    %102 = vmatpush1.xpose.msra.mxu0 0.0
    %103 = vmatprep.subr.mxu0 0.0
    %104 = vmatpush1.xpose.msra.mxu0 0.0
    %105 = vmatprep.subr.mxu0 0.0
    %106 = vmatpush1.xpose.msra.mxu0 0.0
    %107 = vmatprep.subr.mxu0 0.0
    %108 = vmatpush1.xpose.msra.mxu0 0.0
    %109 = vmatprep.subr.mxu0 0.0
    %110 = vmatpush1.xpose.msra.mxu0 0.0
    %111 = vmatprep.subr.mxu0 0.0
    %112 = vmatpush1.xpose.msra.mxu0 0.0
    %113 = vmatprep.subr.mxu0 0.0
    %114 = vmatpush1.xpose.msra.mxu0 0.0
    %115 = vmatprep.subr.mxu0 0.0
    %116 = vmatpush1.xpose.msra.mxu0 0.0
    %117 = vmatprep.subr.mxu0 0.0
    %118 = vmatpush1.xpose.msra.mxu0 0.0
    %119 = vmatprep.subr.mxu0 0.0
    %120 = vmatpush1.xpose.msra.mxu0 0.0
    %121 = vmatprep.subr.mxu0 0.0
    %122 = vmatpush1.xpose.msra.mxu0 0.0
    %123 = vmatprep.subr.mxu0 0.0
    %124 = vmatpush1.xpose.msra.mxu0 0.0
    %125 = vmatprep.subr.mxu0 0.0
    %126 = vmatpush1.xpose.msra.mxu0 0.0
    %127 = vmatprep.subr.mxu0 0.0
    %128 = vmatpush1.xpose.msra.mxu0 0.0
    %129 = vmatprep.mubr.f32.mxu0 0.0
    %130 = vmatmul.mubr.f32.gmra.mrb[0].mxu0 %v47
    %v131 = vpop.f32.mrb[0].mxu0
    %v132 = vadd.f32 0.0, %v131
    %v133 = vpop.f32.mrb[0].mxu0
    %134 = vdwg.mxu0
    %v135 = vadd.f32 %v48, %v132
    %136 = vst [vmem:[#allocation2] sm:$0xff] %v135
    // Predicated region
    $region26: #{tpu_custom_call.1} parent=1 // pred_check
      %p137 = pneg %p41
    $region27: #{tpu_custom_call.1} parent=1 // pred_check_branch
      %139 = sbr.rel (%p137) target = $region29
    $region28: #{tpu_custom_call.1} parent=1 // pred_region
      %v140 = vld [vmem:[#allocation2] sm:$0xff]
      %v141 = vld [vmem:[%s2] sm:$0x1]
      %v143 = vlaneseq
      %v144 = vshrl.u32 %v143, 7
      %v145 = vsub.s32 0, %v144
      %v146 = vrot.slane %v141, %v145
      %v148 = vadd.f32 %v140, %v146
      %149 = vst [vmem:[#allocation8] sm:$0xff] %v148
    $region29: #{tpu_custom_call.1} parent=1 // pred_fallthru
      _
    // Predicated region
    $region30: #{tpu_custom_call.1} parent=1 // pred_check
      _
    $region31: #{tpu_custom_call.1} parent=1 // pred_check_branch
      %151 = sbr.rel (0) target = $region33
    $region32: #{tpu_custom_call.1} parent=1 // pred_region
      %s153 = ssub.s32 128, 128
      %154 = vsyncadd [#allocation5], %s153
      %s156 = sshll.u32 [#allocation8], 4
      %s157 = int_to_ptr.vmem [resolvable:$true] %s156
      %159 = dma.vmem_to_hbm [thread:$0]  %s157, 128, %s3, [#allocation5]
    $region33: #{tpu_custom_call.1} parent=1 // pred_fallthru
      _
    // Predicated region
    $region34: #{tpu_custom_call.1} parent=1 // pred_check
      _
    $region35: #{tpu_custom_call.1} parent=1 // pred_check_branch
      %161 = sbr.rel (0) target = $region37
    $region36: #{tpu_custom_call.1} parent=1 // pred_region
      %162 = dma.done [#allocation5], 128
    $region37: #{tpu_custom_call.1} parent=1 // pred_fallthru
      _
    %163 = vsyncpa [#allocation4], 1
    %164 = vsyncpa [#allocation7], 1
    %165 = vsyncpa [#allocation5], 1

</llo_original>
